<compile_context>
chip_gen: v6e
topology: v6e:2x2x1
jax: 0.10.0
libtpu: 0.0.40
codegen_flags: <defaults>
</compile_context>

<pallas_src>
import functools

import jax
import jax.numpy as jnp
from jax.experimental import pallas as pl
from jax.experimental.pallas import tpu as pltpu


# ----------------------------------------------------------------------------
# Pallas kernels
# ----------------------------------------------------------------------------
def _conv_relu_kernel(w_ref, a_ref, b_ref, o_ref):
    """Fast path (whole K in one block): o = relu(W @ A + bias)."""
    y = jnp.dot(w_ref[...], a_ref[...], preferred_element_type=jnp.float32)
    o_ref[...] = jnp.maximum(y + b_ref[...], 0.0).astype(o_ref.dtype)


def _conv_relu_acc_kernel(w_ref, a_ref, b_ref, o_ref, acc_ref, *, tk):
    """K-tiled path: f32 VMEM accumulator over the (last, 'arbitrary') K axis.
    The full (Cout, K) weight stays resident in VMEM (constant block index);
    the current K slab is taken with a 128-aligned pl.ds slice."""
    k = pl.program_id(2)

    @pl.when(k == 0)
    def _():
        acc_ref[...] = jnp.zeros_like(acc_ref)

    off = pl.multiple_of(k * tk, 128)
    acc_ref[...] += jnp.dot(w_ref[:, pl.ds(off, tk)], a_ref[...],
                            preferred_element_type=jnp.float32)

    @pl.when(k == pl.num_programs(2) - 1)
    def _():
        y = acc_ref[...] + b_ref[...]
        o_ref[...] = jnp.maximum(y, 0.0).astype(o_ref.dtype)


# ----------------------------------------------------------------------------
# Tiling helpers
# ----------------------------------------------------------------------------
def _largest_aligned_divisor(n, cap, align):
    """Largest d with d | n, d % align == 0, d <= cap.  None if there is none."""
    for d in range(min(cap, n), align - 1, -1):
        if n % d == 0 and d % align == 0:
            return d
    return None


def _matmul_bias_relu(wmat, a, bias):
    """relu(W @ A[b] + bias) per batch.

    wmat: (Cout, K) bf16, a: (B, K, S) bf16, bias: (Cout, 1) f32
    -> (B, Cout, S) f32."""
    Cout, K = wmat.shape
    B, _, S = a.shape

    # Spatial (lane) tile: multiple of 128 dividing S; shrink (but keep >=256)
    # until the parallel grid has >= ~8 steps so both v7x cores pipeline.
    ts = _largest_aligned_divisor(S, 1024, 128)
    if ts is None:
        ts = S                                  # full extent is always legal
    else:
        while ts >= 512 and ts % 256 == 0 and B * (S // ts) < 8:
            ts //= 2

    # K tile: keep the whole K in one block when it fits comfortably.
    if K * ts * 2 <= (4 << 20):
        tk = K
    else:
        tk = _largest_aligned_divisor(K, 2048, 128) or K
    n_k = K // tk

    # VMEM budget derived from actual block sizes (+ generous headroom),
    # well under v7x's 64 MiB per-core capacity.
    a_blk = tk * ts * 2
    w_all = Cout * K * 2
    o_blk = Cout * ts * 4
    acc_b = Cout * ts * 4 if n_k > 1 else 0
    need = 2 * (a_blk + w_all + o_blk + 16 * 1024) + acc_b
    vmem_limit = int(min(96 << 20, max(32 << 20, 2 * need)))

    cost = pl.CostEstimate(
        flops=2 * B * S * K * Cout,
        transcendentals=0,
        bytes_accessed=a.size * 2 + wmat.size * 2 + bias.size * 4
        + B * Cout * S * 4,
    )
    out_shape = jax.ShapeDtypeStruct((B, Cout, S), jnp.float32)

    if n_k == 1:
        grid = (B, S // ts)
        out = pl.pallas_call(
            _conv_relu_kernel,
            out_shape=out_shape,
            grid_spec=pltpu.PrefetchScalarGridSpec(
                num_scalar_prefetch=0,
                grid=grid,
                in_specs=[
                    pl.BlockSpec((Cout, K), lambda b, j: (0, 0)),      # resident W
                    pl.BlockSpec((None, K, ts), lambda b, j: (b, 0, j)),
                    pl.BlockSpec((Cout, 1), lambda b, j: (0, 0)),
                ],
                out_specs=pl.BlockSpec((None, Cout, ts), lambda b, j: (b, 0, j)),
            ),
            compiler_params=pltpu.CompilerParams(
                dimension_semantics=("parallel", "parallel"),
                vmem_limit_bytes=vmem_limit),
            cost_estimate=cost,
        )(wmat, a, bias)
    else:
        grid = (B, S // ts, n_k)
        out = pl.pallas_call(
            functools.partial(_conv_relu_acc_kernel, tk=tk),
            out_shape=out_shape,
            grid_spec=pltpu.PrefetchScalarGridSpec(
                num_scalar_prefetch=0,
                grid=grid,
                in_specs=[
                    pl.BlockSpec((Cout, K), lambda b, j, k: (0, 0)),   # resident W
                    pl.BlockSpec((None, tk, ts), lambda b, j, k: (b, k, j)),
                    pl.BlockSpec((Cout, 1), lambda b, j, k: (0, 0)),
                ],
                out_specs=pl.BlockSpec((None, Cout, ts),
                                       lambda b, j, k: (b, 0, j)),
                scratch_shapes=[pltpu.VMEM((Cout, ts), jnp.float32)],
            ),
            compiler_params=pltpu.CompilerParams(
                dimension_semantics=("parallel", "parallel", "arbitrary"),
                vmem_limit_bytes=vmem_limit),
            cost_estimate=cost,
        )(wmat, a, bias)
    return out


# ----------------------------------------------------------------------------
# DownsamplingConvBlock forward: Conv3d(k=s, stride=s, pad=0) + ReLU
# ----------------------------------------------------------------------------
def downsampling_conv_block(x, weight, bias, *, stride=2):
    """x: (B, Cin, D, H, W).  weight: (Cout, Cin, s, s, s).  bias: (Cout,).
    Returns (B, Cout, D//s, H//s, W//s) float32 (PyTorch NCDHW layout)."""
    # TODO(synk): 'batchnorm'/'groupnorm'/'instancenorm' branches of the module
    # are not implemented (module default used here is normalization='none').
    s = stride
    B, Cin, D, H, W = x.shape
    Cout = weight.shape[0]
    Do, Ho, Wo = D // s, H // s, W // s
    S = Do * Ho * Wo
    K = Cin * s * s * s

    x = x[:, :, :Do * s, :Ho * s, :Wo * s]          # PyTorch floor behavior

    # bf16 cast BEFORE the space-to-depth relayout (halves the transpose bytes).
    xb = x.astype(jnp.bfloat16)
    a = xb.reshape(B, Cin, Do, s, Ho, s, Wo, s)
    a = a.transpose(0, 1, 3, 5, 7, 2, 4, 6)         # (B, Cin, kd, kh, kw, Do, Ho, Wo)
    a = a.reshape(B, K, S)                          # channels-first patch matrix

    # (Cout, Cin, kd, kh, kw) -> (Cout, K); column order (cin, kd, kh, kw)
    # matches A's K ordering, so no weight transpose is needed.
    wmat = weight.reshape(Cout, K).astype(jnp.bfloat16)
    bvec = bias.astype(jnp.float32).reshape(Cout, 1)

    y = _matmul_bias_relu(wmat, a, bvec)            # (B, Cout, S) f32, ReLU fused
    return y.reshape(B, Cout, Do, Ho, Wo)           # free row-major reshape


if __name__ == "__main__":
    B, CIN, COUT, SP, STRIDE = 2, 16, 32, 16, 2

    key = jax.random.PRNGKey(0)
    kx, kw, kb = jax.random.split(key, 3)
    x = jax.random.normal(kx, (B, CIN, SP, SP, SP), jnp.float32)
    w = 0.05 * jax.random.normal(kw, (COUT, CIN, STRIDE, STRIDE, STRIDE), jnp.float32)
    b = 0.01 * jax.random.normal(kb, (COUT,), jnp.float32)

    fwd = jax.jit(functools.partial(downsampling_conv_block, stride=STRIDE))
    out = jax.block_until_ready(fwd(x, w, b))
    assert out.shape == (B, COUT, SP // STRIDE, SP // STRIDE, SP // STRIDE), out.shape

    # Reference check (f32 XLA conv) — bf16 matmul operands give small drift.
    ref = jax.lax.conv_general_dilated(
        x, w, window_strides=(STRIDE,) * 3, padding="VALID",
        dimension_numbers=("NCDHW", "OIDHW", "NCDHW"))
    ref = jnp.maximum(ref + b.reshape(1, COUT, 1, 1, 1), 0.0)
    max_err = float(jnp.max(jnp.abs(out - ref)))
    assert max_err < 5e-2, f"max abs err {max_err}"

    print("KERNEL_OK")
</pallas_src>

<mosaic_0001>
module attributes {stable_mosaic.version = 11 : i64} {
  func.func @_conv_relu_kernel(%arg0: i32, %arg1: i32, %arg2: memref<32x128xbf16, #tpu.memory_space<vmem>>, %arg3: memref<1x128x256xbf16, #tpu.memory_space<vmem>>, %arg4: memref<32x1xf32, #tpu.memory_space<vmem>>, %arg5: memref<1x32x256xf32, #tpu.memory_space<vmem>>) attributes {dimension_semantics = [#tpu.dimension_semantics<parallel>, #tpu.dimension_semantics<parallel>], iteration_bounds = array<i64: 2, 2>, scalar_prefetch = 0 : i64, scratch_operands = 0 : i64, tpu.core_type = #tpu.core_type<tc>, window_params = [{pipeline_mode = #tpu.pipeline_mode<synchronous>, transform_indices = @transform_0, window_bounds = array<i64: 32, 128>}, {transform_indices = @transform_1, window_bounds = array<i64: 1, 128, 256>}, {pipeline_mode = #tpu.pipeline_mode<synchronous>, transform_indices = @transform_2, window_bounds = array<i64: 32, 1>}, {transform_indices = @transform_3, window_bounds = array<i64: 1, 32, 256>}]} {
    %c0 = arith.constant 0 : index
    %c0_0 = arith.constant 0 : index
    %0 = vector.load %arg2[%c0, %c0_0] : memref<32x128xbf16, #tpu.memory_space<vmem>>, vector<32x128xbf16>
    %c0_1 = arith.constant 0 : index
    %c0_2 = arith.constant 0 : index
    %c0_3 = arith.constant 0 : index
    %1 = vector.load %arg3[%c0_1, %c0_2, %c0_3] : memref<1x128x256xbf16, #tpu.memory_space<vmem>>, vector<1x128x256xbf16>
    %2 = vector.shape_cast %1 : vector<1x128x256xbf16> to vector<128x256xbf16>
    %cst = arith.constant dense<0.000000e+00> : vector<32x256xf32>
    %3 = tpu.matmul %0, %2, %cst {dimension_numbers = #tpu.dot_dimension_numbers<[1], [0], [0], [1], [0, 0, 1, 1], [], []>} : vector<32x128xbf16>, vector<128x256xbf16>, vector<32x256xf32> -> vector<32x256xf32>
    %c0_4 = arith.constant 0 : index
    %c0_5 = arith.constant 0 : index
    %4 = vector.load %arg4[%c0_4, %c0_5] : memref<32x1xf32, #tpu.memory_space<vmem>>, vector<32x1xf32>
    %5 = vector.broadcast %4 : vector<32x1xf32> to vector<32x256xf32>
    %6 = arith.addf %3, %5 : vector<32x256xf32>
    %cst_6 = arith.constant 0.000000e+00 : f32
    %7 = vector.broadcast %cst_6 : f32 to vector<32x256xf32>
    %8 = arith.maximumf %6, %7 : vector<32x256xf32>
    %c0_7 = arith.constant 0 : index
    %c0_8 = arith.constant 0 : index
    %c0_9 = arith.constant 0 : index
    %9 = vector.load %arg5[%c0_7, %c0_8, %c0_9] : memref<1x32x256xf32, #tpu.memory_space<vmem>>, vector<1x32x256xf32>
    %10 = vector.shape_cast %9 : vector<1x32x256xf32> to vector<32x256xf32>
    %11 = vector.shape_cast %8 : vector<32x256xf32> to vector<1x32x256xf32>
    tpu.vector_store %arg5[%c0_7, %c0_8, %c0_9], %11 {strides = array<i32>} : memref<1x32x256xf32, #tpu.memory_space<vmem>>, vector<1x32x256xf32>,
    return
  }
  func.func @transform_0(%arg0: i32, %arg1: i32) -> (i32, i32) {
    %c0_i32 = arith.constant 0 : i32
    %c0_i32_0 = arith.constant 0 : i32
    %c0_i32_1 = arith.constant 0 : i32
    return %c0_i32, %c0_i32_0 : i32, i32
  }
  func.func @transform_1(%arg0: i32, %arg1: i32) -> (i32, i32, i32) {
    %c0_i32 = arith.constant 0 : i32
    %c0_i32_0 = arith.constant 0 : i32
    return %arg0, %c0_i32, %arg1 : i32, i32, i32
  }
  func.func @transform_2(%arg0: i32, %arg1: i32) -> (i32, i32) {
    %c0_i32 = arith.constant 0 : i32
    %c0_i32_0 = arith.constant 0 : i32
    %c0_i32_1 = arith.constant 0 : i32
    return %c0_i32, %c0_i32_0 : i32, i32
  }
  func.func @transform_3(%arg0: i32, %arg1: i32) -> (i32, i32, i32) {
    %c0_i32 = arith.constant 0 : i32
    %c0_i32_0 = arith.constant 0 : i32
    return %arg0, %c0_i32, %arg1 : i32, i32, i32
  }
}

</mosaic_0001>

<llo_original>
// kernel: downsampling_conv_block.1
$region0: #{downsampling_conv_block.1}
  #allocation0 [shape = 'u32[]', space=smem, size = 0x4, offset = 0x4, fixed_abs, tag = 'smem constant byte address 0x4 - core index']
  #allocation1 [shape = 'u32[144,128]{1,0:T(1,128)}', space=vmem, size = 0x12000, scoped, tag = 'internal scratch']
  %s0 = inlined_call_operand.vmem [shape: bf16[32,128], index: 0, kind: input, shape index: {}]
  %s1 = inlined_call_operand.vmem [shape: bf16[2,128,512], index: 1, kind: input, shape index: {}]
  %s2 = inlined_call_operand.vmem [shape: f32[32,1], index: 2, kind: input, shape index: {}]
  %s3 = inlined_call_operand.vmem [shape: f32[2,32,512], index: 3, kind: output, shape index: {}]
  %s4 = sld [smem:[#allocation0]]
  $region102: #{downsampling_conv_block.1} parent=0
    _
  %s6 = ssub.s32 1, %s4
  %s7 = scalar_select 0, %s6, %s4
  $region1: #{downsampling_conv_block.1} parent=0
    #allocation2 [shape = 'u8[131072]{0}', space=vmem, size = 0x20000, scoped, tag = 'input window, operand 1']
    #allocation3 [shape = 'u8[65536]{0}', space=vmem, size = 0x10000, scoped, tag = 'output window, operand 0']
    loop: start=0, step=1, limit=6
    $region2: #{downsampling_conv_block.1} parent=1 // loop_pre_header
      _
    $region3: #{downsampling_conv_block.1} parent=1 // loop_header
      %s9 = sphi 0, %s13
      %p10 = scmp.ge.s32.totalorder %s9, 6
      %s16 = sphi 0, %s28
      %s17 = sphi 0, %s24
      %s18 = sphi 0, %s16
      %s19 = sphi 0, %s17
      %s20 = sphi 0, %s18
      %s21 = sphi 0, %s19
      %s29 = sphi 0, %s29
      %s31 = sphi 0, %s29
      %s32 = sphi 0, %s31
      %s46 = sphi 0, %s32
      %s54 = sphi 0, %s56
      %s57 = sphi 0, %s54
      %s58 = sphi 0, %s57
      %s74 = sphi 0, %s58
      %s78 = sphi 0, %s78
      %s80 = sphi 0, %s78
      %s81 = sphi 0, %s80
      %s95 = sphi 0, %s81
      %s103 = sphi 0, %s105
      %s106 = sphi 0, %s103
      %s107 = sphi 0, %s106
      %s123 = sphi 0, %s107
    $region4: #{downsampling_conv_block.1} parent=1 // loop_header_branch
      %12 = sbr.rel (%p10) target = $region8
    $region5: #{downsampling_conv_block.1} parent=1 // loop_body
      %s14 = ssub.s32 %s9, 1
      %s15 = ssub.s32 %s9, 2
      %s22 = sadd.s32 1, %s17
      %p23 = scmp.ge.s32.totalorder %s22, 2
      %s24 = scalar_select %p23, 0, %s22
      %s25 = sadd.s32 1, %s16
      %s26 = scalar_select %p23, %s25, %s16
      %p27 = scmp.ge.s32.totalorder %s26, 2
      %s28 = scalar_select %p27, 0, %s26
      %s30 = sadd.s32 %s29, 1
      %p33 = scmp.eq.s32.totalorder %s9, 3
      %p34 = scmp.ne.s32.totalorder %s29, %s31
      %p35 = scmp.eq.s32.totalorder %s9, 0
      %p36 = por %p34, %p35
      %p37 = scmp.ne.s32.totalorder %s29, %s31
      %p38 = scmp.eq.s32.totalorder %s14, 3
      %p39 = por %p37, %p38
      %p40 = scmp.ne.s32.totalorder %s31, %s32
      %p41 = scmp.eq.s32.totalorder %s14, 0
      %p42 = por %p40, %p41
      %p43 = scmp.ne.s32.totalorder %s31, %s32
      %p44 = scmp.eq.s32.totalorder %s15, 3
      %p45 = por %p43, %p44
      %p47 = scmp.ne.s32.totalorder %s32, %s46
      %p48 = scmp.eq.s32.totalorder %s15, 0
      %p49 = por %p47, %p48
      %s50 = ssub.s32 %s16, %s28
      %s51 = ssub.s32 %s17, %s24
      %s52 = sor.u32 %s50, %s51
      %p53 = scmp.eq.s32.totalorder %s52, 0
      %s55 = sadd.s32 %s54, 1
      %s56 = scalar_select %p53, %s54, %s55
      %p59 = pneg %p53
      %p60 = scmp.eq.s32.totalorder %s9, 3
      %p61 = por %p59, %p60
      %p62 = scmp.ne.s32.totalorder %s54, %s57
      %p63 = scmp.eq.s32.totalorder %s9, 0
      %p64 = por %p62, %p63
      %p65 = scmp.ne.s32.totalorder %s54, %s57
      %p66 = scmp.eq.s32.totalorder %s14, 3
      %p67 = por %p65, %p66
      %p68 = scmp.ne.s32.totalorder %s57, %s58
      %p69 = scmp.eq.s32.totalorder %s14, 0
      %p70 = por %p68, %p69
      %p71 = scmp.ne.s32.totalorder %s57, %s58
      %p72 = scmp.eq.s32.totalorder %s15, 3
      %p73 = por %p71, %p72
      %p75 = scmp.ne.s32.totalorder %s58, %s74
      %p76 = scmp.eq.s32.totalorder %s15, 0
      %p77 = por %p75, %p76
      %s79 = sadd.s32 %s78, 1
      %p82 = scmp.eq.s32.totalorder %s9, 3
      %p83 = scmp.ne.s32.totalorder %s78, %s80
      %p84 = scmp.eq.s32.totalorder %s9, 0
      %p85 = por %p83, %p84
      %p86 = scmp.ne.s32.totalorder %s78, %s80
      %p87 = scmp.eq.s32.totalorder %s14, 3
      %p88 = por %p86, %p87
      %p89 = scmp.ne.s32.totalorder %s80, %s81
      %p90 = scmp.eq.s32.totalorder %s14, 0
      %p91 = por %p89, %p90
      %p92 = scmp.ne.s32.totalorder %s80, %s81
      %p93 = scmp.eq.s32.totalorder %s15, 3
      %p94 = por %p92, %p93
      %p96 = scmp.ne.s32.totalorder %s81, %s95
      %p97 = scmp.eq.s32.totalorder %s15, 0
      %p98 = por %p96, %p97
      %s99 = ssub.s32 %s16, %s28
      %s100 = ssub.s32 %s17, %s24
      %s101 = sor.u32 %s99, %s100
      %p102 = scmp.eq.s32.totalorder %s101, 0
      %s104 = sadd.s32 %s103, 1
      %s105 = scalar_select %p102, %s103, %s104
      %p108 = pneg %p102
      %p109 = scmp.eq.s32.totalorder %s9, 3
      %p110 = por %p108, %p109
      %p111 = scmp.ne.s32.totalorder %s103, %s106
      %p112 = scmp.eq.s32.totalorder %s9, 0
      %p113 = por %p111, %p112
      %p114 = scmp.ne.s32.totalorder %s103, %s106
      %p115 = scmp.eq.s32.totalorder %s14, 3
      %p116 = por %p114, %p115
      %p117 = scmp.ne.s32.totalorder %s106, %s107
      %p118 = scmp.eq.s32.totalorder %s14, 0
      %p119 = por %p117, %p118
      %p120 = scmp.ne.s32.totalorder %s106, %s107
      %p121 = scmp.eq.s32.totalorder %s15, 3
      %p122 = por %p120, %p121
      %p124 = scmp.ne.s32.totalorder %s107, %s123
      %p125 = scmp.eq.s32.totalorder %s15, 0
      %p126 = por %p124, %p125
      %p127 = scmp.le.s32.totalorder 1, %s9
      %p128 = scmp.lt.s32.totalorder %s9, 5
      %p129 = pnand %p127, %p128
      %p130 = pneg %p129
      // Predicated region
      $region9: #{downsampling_conv_block.1} parent=5 // pred_check
        _
      $region10: #{downsampling_conv_block.1} parent=5 // pred_check_branch
        %132 = sbr.rel (%p129) target = $region12
      $region11: #{downsampling_conv_block.1} parent=5 // pred_region
        %s133 = ssub.s32 %s9, 1
        // Predicated region
        $region13: #{downsampling_conv_block.1} parent=11 // pred_check
          %p134 = pneg %p42
        $region14: #{downsampling_conv_block.1} parent=11 // pred_check_branch
          %136 = sbr.rel (%p134) target = $region16
        $region15: #{downsampling_conv_block.1} parent=11 // pred_region
          _
        $region16: #{downsampling_conv_block.1} parent=11 // pred_fallthru
          _
        // Predicated region
        $region17: #{downsampling_conv_block.1} parent=11 // pred_check
          %p137 = pneg %p91
        $region18: #{downsampling_conv_block.1} parent=11 // pred_check_branch
          %139 = sbr.rel (%p137) target = $region20
        $region19: #{downsampling_conv_block.1} parent=11 // pred_region
          _
        $region20: #{downsampling_conv_block.1} parent=11 // pred_fallthru
          _
      $region12: #{downsampling_conv_block.1} parent=5 // pred_fallthru
        _
      %p140 = scmp.lt.s32.totalorder %s9, 4
      // Predicated region
      $region21: #{downsampling_conv_block.1} parent=5 // pred_check
        %p141 = pneg %p140
      $region22: #{downsampling_conv_block.1} parent=5 // pred_check_branch
        %143 = sbr.rel (%p141) target = $region24
      $region23: #{downsampling_conv_block.1} parent=5 // pred_region
        // Predicated region
        $region25: #{downsampling_conv_block.1} parent=23 // pred_check
          %p144 = pneg %p64
        $region26: #{downsampling_conv_block.1} parent=23 // pred_check_branch
          %146 = sbr.rel (%p144) target = $region28
        $region27: #{downsampling_conv_block.1} parent=23 // pred_region
          %s147 = sand.u32 %s54, 1
          %s148 = sand.u32 %s54, 1
          %s149 = smul.addr %s148, 128
          %s150 = scalar_lea.vmem [#allocation2], %s149
          %s151 = smul.u32 2, %s17
          %s152 = smul.addr %s16, 64
          %s153 = sadd.s32 %s151, %s152
          %s154 = smul.addr %s153, 4
          %s155 = scalar_lea.vmem %s1, %s154
          // Predicated region
          $region29: #{downsampling_conv_block.1} parent=27 // pred_check
            _
          $region30: #{downsampling_conv_block.1} parent=27 // pred_check_branch
            %157 = sbr.rel (0) target = $region32
          $region31: #{downsampling_conv_block.1} parent=27 // pred_region
            // Predicated region
            $region33: #{downsampling_conv_block.1} parent=31 // pred_check
              _
            $region34: #{downsampling_conv_block.1} parent=31 // pred_check_branch
              %159 = sbr.rel (0) target = $region36
            $region35: #{downsampling_conv_block.1} parent=31 // pred_region
              // Predicated region
              $region48: #{downsampling_conv_block.1} parent=35 // pred_check
                _
              $region49: #{downsampling_conv_block.1} parent=35 // pred_check_branch
                %205 = sbr.rel (0) target = $region51
              $region50: #{downsampling_conv_block.1} parent=35 // pred_region
                loop: start=0, step=1, limit=1
                $region52: #{downsampling_conv_block.1} parent=50 // loop_pre_header
                  _
                $region53: #{downsampling_conv_block.1} parent=50 // loop_header
                  %s207 = sphi 0, %s211
                  %p208 = scmp.ge.s32.totalorder %s207, 1
                  %s212 = sphi %s155, %s155
                  %s213 = sphi %s150, %s150
                $region54: #{downsampling_conv_block.1} parent=50 // loop_header_branch
                  %210 = sbr.rel (%p208) target = $region58
                $region55: #{downsampling_conv_block.1} parent=50 // loop_body
                  %v214 = vld [vmem:[%s212] sm:$0xff]
                  %215 = vst [vmem:[%s213] sm:$0xff] %v214
                  %v216 = vld [vmem:[%s212 + $0x10] sm:$0xff]
                  %217 = vst [vmem:[%s213 + $0x8] sm:$0xff] %v216
                  %v218 = vld [vmem:[%s212 + $0x20] sm:$0xff]
                  %219 = vst [vmem:[%s213 + $0x10] sm:$0xff] %v218
                  %v220 = vld [vmem:[%s212 + $0x30] sm:$0xff]
                  %221 = vst [vmem:[%s213 + $0x18] sm:$0xff] %v220
                  %v222 = vld [vmem:[%s212 + $0x40] sm:$0xff]
                  %223 = vst [vmem:[%s213 + $0x20] sm:$0xff] %v222
                  %v224 = vld [vmem:[%s212 + $0x50] sm:$0xff]
                  %225 = vst [vmem:[%s213 + $0x28] sm:$0xff] %v224
                  %v226 = vld [vmem:[%s212 + $0x60] sm:$0xff]
                  %227 = vst [vmem:[%s213 + $0x30] sm:$0xff] %v226
                  %v228 = vld [vmem:[%s212 + $0x70] sm:$0xff]
                  %229 = vst [vmem:[%s213 + $0x38] sm:$0xff] %v228
                  %v230 = vld [vmem:[%s212 + $0x80] sm:$0xff]
                  %231 = vst [vmem:[%s213 + $0x40] sm:$0xff] %v230
                  %v232 = vld [vmem:[%s212 + $0x90] sm:$0xff]
                  %233 = vst [vmem:[%s213 + $0x48] sm:$0xff] %v232
                  %v234 = vld [vmem:[%s212 + $0xa0] sm:$0xff]
                  %235 = vst [vmem:[%s213 + $0x50] sm:$0xff] %v234
                  %v236 = vld [vmem:[%s212 + $0xb0] sm:$0xff]
                  %237 = vst [vmem:[%s213 + $0x58] sm:$0xff] %v236
                  %v238 = vld [vmem:[%s212 + $0xc0] sm:$0xff]
                  %239 = vst [vmem:[%s213 + $0x60] sm:$0xff] %v238
                  %v240 = vld [vmem:[%s212 + $0xd0] sm:$0xff]
                  %241 = vst [vmem:[%s213 + $0x68] sm:$0xff] %v240
                  %v242 = vld [vmem:[%s212 + $0xe0] sm:$0xff]
                  %243 = vst [vmem:[%s213 + $0x70] sm:$0xff] %v242
                  %v244 = vld [vmem:[%s212 + $0xf0] sm:$0xff]
                  %245 = vst [vmem:[%s213 + $0x78] sm:$0xff] %v244
                $region56: #{downsampling_conv_block.1} parent=50 // loop_footer
                  %s211 = sadd.s32 1, %s207
                $region57: #{downsampling_conv_block.1} parent=50 // loop_footer_branch
                  %206 = sbr.rel target = $region53
                $region58: #{downsampling_conv_block.1} parent=50 // loop_exit
                  _
              $region51: #{downsampling_conv_block.1} parent=35 // pred_fallthru
                _
              // Predicated region
              $region59: #{downsampling_conv_block.1} parent=35 // pred_check
                _
              $region60: #{downsampling_conv_block.1} parent=35 // pred_check_branch
                %247 = sbr.rel target = $region62
              $region61: #{downsampling_conv_block.1} parent=35 // pred_region
                _
              $region62: #{downsampling_conv_block.1} parent=35 // pred_fallthru
                _
            $region36: #{downsampling_conv_block.1} parent=31 // pred_fallthru
              _
            // Predicated region
            $region37: #{downsampling_conv_block.1} parent=31 // pred_check
              _
            $region38: #{downsampling_conv_block.1} parent=31 // pred_check_branch
              %161 = sbr.rel target = $region40
            $region39: #{downsampling_conv_block.1} parent=31 // pred_region
              %s163 = ssub.s32 256, 1
              loop: start=0, step=1, limit=1
              $region41: #{downsampling_conv_block.1} parent=39 // loop_pre_header
                _
              $region42: #{downsampling_conv_block.1} parent=39 // loop_header
                %s165 = sphi 0, %s169
                %p166 = scmp.ge.s32.totalorder %s165, 1
                %s170 = sphi %s155, %s155
                %s171 = sphi %s150, %s150
              $region43: #{downsampling_conv_block.1} parent=39 // loop_header_branch
                %168 = sbr.rel (%p166) target = $region47
              $region44: #{downsampling_conv_block.1} parent=39 // loop_body
                %v172 = vld [vmem:[%s170] sm:%s163]
                %173 = vst [vmem:[%s171] sm:%s163] %v172
                %v174 = vld [vmem:[%s170 + $0x10] sm:%s163]
                %175 = vst [vmem:[%s171 + $0x8] sm:%s163] %v174
                %v176 = vld [vmem:[%s170 + $0x20] sm:%s163]
                %177 = vst [vmem:[%s171 + $0x10] sm:%s163] %v176
                %v178 = vld [vmem:[%s170 + $0x30] sm:%s163]
                %179 = vst [vmem:[%s171 + $0x18] sm:%s163] %v178
                %v180 = vld [vmem:[%s170 + $0x40] sm:%s163]
                %181 = vst [vmem:[%s171 + $0x20] sm:%s163] %v180
                %v182 = vld [vmem:[%s170 + $0x50] sm:%s163]
                %183 = vst [vmem:[%s171 + $0x28] sm:%s163] %v182
                %v184 = vld [vmem:[%s170 + $0x60] sm:%s163]
                %185 = vst [vmem:[%s171 + $0x30] sm:%s163] %v184
                %v186 = vld [vmem:[%s170 + $0x70] sm:%s163]
                %187 = vst [vmem:[%s171 + $0x38] sm:%s163] %v186
                %v188 = vld [vmem:[%s170 + $0x80] sm:%s163]
                %189 = vst [vmem:[%s171 + $0x40] sm:%s163] %v188
                %v190 = vld [vmem:[%s170 + $0x90] sm:%s163]
                %191 = vst [vmem:[%s171 + $0x48] sm:%s163] %v190
                %v192 = vld [vmem:[%s170 + $0xa0] sm:%s163]
                %193 = vst [vmem:[%s171 + $0x50] sm:%s163] %v192
                %v194 = vld [vmem:[%s170 + $0xb0] sm:%s163]
                %195 = vst [vmem:[%s171 + $0x58] sm:%s163] %v194
                %v196 = vld [vmem:[%s170 + $0xc0] sm:%s163]
                %197 = vst [vmem:[%s171 + $0x60] sm:%s163] %v196
                %v198 = vld [vmem:[%s170 + $0xd0] sm:%s163]
                %199 = vst [vmem:[%s171 + $0x68] sm:%s163] %v198
                %v200 = vld [vmem:[%s170 + $0xe0] sm:%s163]
                %201 = vst [vmem:[%s171 + $0x70] sm:%s163] %v200
                %v202 = vld [vmem:[%s170 + $0xf0] sm:%s163]
                %203 = vst [vmem:[%s171 + $0x78] sm:%s163] %v202
              $region45: #{downsampling_conv_block.1} parent=39 // loop_footer
                %s169 = sadd.s32 1, %s165
              $region46: #{downsampling_conv_block.1} parent=39 // loop_footer_branch
                %164 = sbr.rel target = $region42
              $region47: #{downsampling_conv_block.1} parent=39 // loop_exit
                _
            $region40: #{downsampling_conv_block.1} parent=31 // pred_fallthru
              _
          $region32: #{downsampling_conv_block.1} parent=27 // pred_fallthru
            _
          %248 = vnop
        $region28: #{downsampling_conv_block.1} parent=23 // pred_fallthru
          _
      $region24: #{downsampling_conv_block.1} parent=5 // pred_fallthru
        _
      %p249 = scmp.le.s32.totalorder 1, %s9
      %p250 = scmp.lt.s32.totalorder %s9, 5
      %p251 = pnand %p249, %p250
      %p252 = pneg %p251
      // Predicated region
      $region63: #{downsampling_conv_block.1} parent=5 // pred_check
        _
      $region64: #{downsampling_conv_block.1} parent=5 // pred_check_branch
        %254 = sbr.rel (%p251) target = $region66
      $region65: #{downsampling_conv_block.1} parent=5 // pred_region
        %s255 = ssub.s32 %s9, 1
        %s256 = sand.u32 %s57, 1
        %s257 = sand.u32 %s57, 1
        %s258 = smul.addr %s257, 128
        %s259 = scalar_lea.vmem [#allocation2], %s258
        // Predicated region
        $region67: #{downsampling_conv_block.1} parent=65 // pred_check
          %p260 = pneg %p70
        $region68: #{downsampling_conv_block.1} parent=65 // pred_check_branch
          %262 = sbr.rel (%p260) target = $region70
        $region69: #{downsampling_conv_block.1} parent=65 // pred_region
          _
        $region70: #{downsampling_conv_block.1} parent=65 // pred_fallthru
          _
        %p263 = pneg %p42
        %p264 = pneg %p39
        %s265 = sand.u32 %s57, 1
        %s266 = sand.u32 %s57, 1
        %s267 = smul.addr %s266, 128
        %s268 = scalar_lea.vmem [#allocation2], %s267
        %p269 = pneg %p70
        %p270 = pneg %p67
        %p271 = pneg %p91
        %p272 = pneg %p88
        %p273 = pneg %p119
        %p274 = pneg %p116
        %s275 = sand.u32 %s106, 1
        %s276 = sand.u32 %s106, 1
        %s277 = smul.addr %s276, 64
        %s278 = scalar_lea.vmem [#allocation3], %s277
        %s279 = smul.u32 2, %s19
        %s280 = smul.u32 2, %s19
        %v282 = vld [vmem:[%s0] sm:$0xf]
        %v283 = vld [vmem:[%s0 + $0x4] sm:$0xf]
        %v284 = vld [vmem:[%s0 + $0x8] sm:$0xf]
        %v285 = vld [vmem:[%s0 + $0xc] sm:$0xf]
        %v286 = vld [vmem:[%s259] sm:$0xff]
        %v287 = vld [vmem:[%s259 + $0x8] sm:$0xff]
        %v288 = vld [vmem:[%s259 + $0x10] sm:$0xff]
        %v289 = vld [vmem:[%s259 + $0x18] sm:$0xff]
        %v290 = vld [vmem:[%s259 + $0x20] sm:$0xff]
        %v291 = vld [vmem:[%s259 + $0x28] sm:$0xff]
        %v292 = vld [vmem:[%s259 + $0x30] sm:$0xff]
        %v293 = vld [vmem:[%s259 + $0x38] sm:$0xff]
        %v294 = vld [vmem:[%s259 + $0x40] sm:$0xff]
        %v295 = vld [vmem:[%s259 + $0x48] sm:$0xff]
        %v296 = vld [vmem:[%s259 + $0x50] sm:$0xff]
        %v297 = vld [vmem:[%s259 + $0x58] sm:$0xff]
        %v298 = vld [vmem:[%s259 + $0x60] sm:$0xff]
        %v299 = vld [vmem:[%s259 + $0x68] sm:$0xff]
        %v300 = vld [vmem:[%s259 + $0x70] sm:$0xff]
        %v301 = vld [vmem:[%s259 + $0x78] sm:$0xff]
        %v302 = vld [vmem:[%s2] sm:$0xff]
        %v303 = vld [vmem:[%s2 + $0x8] sm:$0xff]
        %v304 = vld [vmem:[%s2 + $0x10] sm:$0xff]
        %v305 = vld [vmem:[%s2 + $0x18] sm:$0xff]
        %307 = vset.pattern.permute.xlu0 0
        %308 = vperm.xlu0 %307, %v302
        %v309 = vpop.permute.xlu0 %308
        %312 = vset.pattern.permute.xlu0 0
        %313 = vperm.xlu0 %312, %v303
        %v314 = vpop.permute.xlu0 %313
        %317 = vset.pattern.permute.xlu0 0
        %318 = vperm.xlu0 %317, %v304
        %v319 = vpop.permute.xlu0 %318
        %322 = vset.pattern.permute.xlu0 0
        %323 = vperm.xlu0 %322, %v305
        %v324 = vpop.permute.xlu0 %323
        %v330 = vunpack.c.l.b16 %v282
        %v331 = vunpack.c.l.b16 %v283
        %v332 = vunpack.c.l.b16 %v284
        %v333 = vunpack.c.l.b16 %v285
        %v334 = vpack.c.b16 %v331, %v330
        %v335 = vpack.c.b16 %v333, %v332
        %v354 = vunpack.c.l.b16 %v286
        %v355 = vunpack.c.h.b16 %v286
        %v356 = vunpack.c.l.b16 %v287
        %v357 = vunpack.c.h.b16 %v287
        %v358 = vunpack.c.l.b16 %v288
        %v359 = vunpack.c.h.b16 %v288
        %v360 = vunpack.c.l.b16 %v289
        %v361 = vunpack.c.h.b16 %v289
        %v362 = vunpack.c.l.b16 %v290
        %v363 = vunpack.c.h.b16 %v290
        %v364 = vunpack.c.l.b16 %v291
        %v365 = vunpack.c.h.b16 %v291
        %v366 = vunpack.c.l.b16 %v292
        %v367 = vunpack.c.h.b16 %v292
        %v368 = vunpack.c.l.b16 %v293
        %v369 = vunpack.c.h.b16 %v293
        %v370 = vunpack.c.l.b16 %v294
        %v371 = vunpack.c.h.b16 %v294
        %v372 = vunpack.c.l.b16 %v295
        %v373 = vunpack.c.h.b16 %v295
        %v374 = vunpack.c.l.b16 %v296
        %v375 = vunpack.c.h.b16 %v296
        %v376 = vunpack.c.l.b16 %v297
        %v377 = vunpack.c.h.b16 %v297
        %v378 = vunpack.c.l.b16 %v298
        %v379 = vunpack.c.h.b16 %v298
        %v380 = vunpack.c.l.b16 %v299
        %v381 = vunpack.c.h.b16 %v299
        %v382 = vunpack.c.l.b16 %v300
        %v383 = vunpack.c.h.b16 %v300
        %v384 = vunpack.c.l.b16 %v301
        %v385 = vunpack.c.h.b16 %v301
        %v386 = vpack.c.b16 %v356, %v354
        %v387 = vpack.c.b16 %v357, %v355
        %v388 = vpack.c.b16 %v360, %v358
        %v389 = vpack.c.b16 %v361, %v359
        %v390 = vpack.c.b16 %v364, %v362
        %v391 = vpack.c.b16 %v365, %v363
        %v392 = vpack.c.b16 %v368, %v366
        %v393 = vpack.c.b16 %v369, %v367
        %v394 = vpack.c.b16 %v372, %v370
        %v395 = vpack.c.b16 %v373, %v371
        %v396 = vpack.c.b16 %v376, %v374
        %v397 = vpack.c.b16 %v377, %v375
        %v398 = vpack.c.b16 %v380, %v378
        %v399 = vpack.c.b16 %v381, %v379
        %v400 = vpack.c.b16 %v384, %v382
        %v401 = vpack.c.b16 %v385, %v383
        %418 = vmatprep.subr.bf16.mxu0 %v401
        %419 = vmatpush1.bf16.msra.mxu0 %v400
        %420 = vmatprep.subr.bf16.mxu0 %v399
        %421 = vmatpush1.bf16.msra.mxu0 %v398
        %422 = vmatprep.subr.bf16.mxu0 %v397
        %423 = vmatpush1.bf16.msra.mxu0 %v396
        %424 = vmatprep.subr.bf16.mxu0 %v395
        %425 = vmatpush1.bf16.msra.mxu0 %v394
        %426 = vmatprep.subr.bf16.mxu0 %v393
        %427 = vmatpush1.bf16.msra.mxu0 %v392
        %428 = vmatprep.subr.bf16.mxu0 %v391
        %429 = vmatpush1.bf16.msra.mxu0 %v390
        %430 = vmatprep.subr.bf16.mxu0 %v389
        %431 = vmatpush1.bf16.msra.mxu0 %v388
        %432 = vmatprep.subr.bf16.mxu0 %v387
        %433 = vmatpush1.bf16.msra.mxu0 %v386
        %434 = vmatprep.subr.bf16.mxu0 0
        %435 = vmatpush2.bf16.msra.mxu0 0
        %436 = vmatprep.subr.bf16.mxu0 0
        %437 = vmatpush2.bf16.msra.mxu0 0
        %438 = vmatprep.subr.bf16.mxu0 0
        %439 = vmatpush2.bf16.msra.mxu0 0
        %440 = vmatprep.subr.bf16.mxu0 0
        %441 = vmatpush2.bf16.msra.mxu0 0
        %442 = vmatprep.subr.bf16.mxu0 0
        %443 = vmatpush2.bf16.msra.mxu0 0
        %444 = vmatprep.subr.bf16.mxu0 0
        %445 = vmatpush2.bf16.msra.mxu0 0
        %446 = vmatprep.subr.bf16.mxu0 0
        %447 = vmatpush2.bf16.msra.mxu0 0
        %448 = vmatprep.subr.bf16.mxu0 0
        %449 = vmatpush2.bf16.msra.mxu0 0
        %450 = vmatprep.mubr.bf16.mxu0 0
        %451 = vmatmul.mubr.bf16.gmra.mxu0 %v334
        %v452 = vpop.f32.mrf.mxu0
        %v453 = vadd.f32 %v309, %v452
        %v454 = vpop.f32.mrf.mxu0
        %v455 = vadd.f32 %v309, %v454
        %v456 = vpop.f32.mrf.mxu0
        %v457 = vadd.f32 %v314, %v456
        %v458 = vpop.f32.mrf.mxu0
        %v459 = vadd.f32 %v314, %v458
        %460 = vmatprep.mubr.bf16.mxu0 0
        %461 = vmatmul.mubr.bf16.gmra.mxu0 %v335
        %v462 = vpop.f32.mrf.mxu0
        %v463 = vadd.f32 %v319, %v462
        %v464 = vpop.f32.mrf.mxu0
        %v465 = vadd.f32 %v319, %v464
        %v466 = vpop.f32.mrf.mxu0
        %v467 = vadd.f32 %v324, %v466
        %v468 = vpop.f32.mrf.mxu0
        %v469 = vadd.f32 %v324, %v468
        %470 = vdwg.mxu0
        %v471 = vmax.f32 %v453, 0.0
        %v472 = vmax.f32 %v455, 0.0
        %v473 = vmax.f32 %v457, 0.0
        %v474 = vmax.f32 %v459, 0.0
        %v475 = vmax.f32 %v463, 0.0
        %v476 = vmax.f32 %v465, 0.0
        %v477 = vmax.f32 %v467, 0.0
        %v478 = vmax.f32 %v469, 0.0
        %479 = vst [vmem:[%s278] sm:$0xff] %v471
        %480 = vst [vmem:[%s278 + $0x8] sm:$0xff] %v472
        %481 = vst [vmem:[%s278 + $0x10] sm:$0xff] %v473
        %482 = vst [vmem:[%s278 + $0x18] sm:$0xff] %v474
        %483 = vst [vmem:[%s278 + $0x20] sm:$0xff] %v475
        %484 = vst [vmem:[%s278 + $0x28] sm:$0xff] %v476
        %485 = vst [vmem:[%s278 + $0x30] sm:$0xff] %v477
        %486 = vst [vmem:[%s278 + $0x38] sm:$0xff] %v478
        %s487 = sand.u32 %s106, 1
        %s488 = sand.u32 %s106, 1
        %s489 = smul.addr %s488, 64
        %s490 = scalar_lea.vmem [#allocation3], %s489
        // Predicated region
        $region71: #{downsampling_conv_block.1} parent=65 // pred_check
          %p491 = pneg %p116
        $region72: #{downsampling_conv_block.1} parent=65 // pred_check_branch
          %493 = sbr.rel (%p491) target = $region74
        $region73: #{downsampling_conv_block.1} parent=65 // pred_region
          %s494 = smul.u32 2, %s19
          %s495 = smul.addr %s18, 16
          %s496 = sadd.s32 %s494, %s495
          %s497 = smul.addr %s496, 8
          %s498 = scalar_lea.vmem %s3, %s497
          // Predicated region
          $region75: #{downsampling_conv_block.1} parent=73 // pred_check
            _
          $region76: #{downsampling_conv_block.1} parent=73 // pred_check_branch
            %500 = sbr.rel (0) target = $region78
          $region77: #{downsampling_conv_block.1} parent=73 // pred_region
            // Predicated region
            $region79: #{downsampling_conv_block.1} parent=77 // pred_check
              _
            $region80: #{downsampling_conv_block.1} parent=77 // pred_check_branch
              %502 = sbr.rel (0) target = $region82
            $region81: #{downsampling_conv_block.1} parent=77 // pred_region
              loop: start=0, step=1, limit=1
              $region83: #{downsampling_conv_block.1} parent=81 // loop_pre_header
                _
              $region84: #{downsampling_conv_block.1} parent=81 // loop_header
                %s504 = sphi 0, %s508
                %p505 = scmp.ge.s32.totalorder %s504, 1
                %s509 = sphi %s490, %s490
                %s510 = sphi %s498, %s498
              $region85: #{downsampling_conv_block.1} parent=81 // loop_header_branch
                %507 = sbr.rel (%p505) target = $region89
              $region86: #{downsampling_conv_block.1} parent=81 // loop_body
                %v511 = vld [vmem:[%s509] sm:$0xff]
                %512 = vst [vmem:[%s510] sm:$0xff] %v511
                %v513 = vld [vmem:[%s509 + $0x8] sm:$0xff]
                %514 = vst [vmem:[%s510 + $0x8] sm:$0xff] %v513
                %v515 = vld [vmem:[%s509 + $0x10] sm:$0xff]
                %516 = vst [vmem:[%s510 + $0x20] sm:$0xff] %v515
                %v517 = vld [vmem:[%s509 + $0x18] sm:$0xff]
                %518 = vst [vmem:[%s510 + $0x28] sm:$0xff] %v517
                %v519 = vld [vmem:[%s509 + $0x20] sm:$0xff]
                %520 = vst [vmem:[%s510 + $0x40] sm:$0xff] %v519
                %v521 = vld [vmem:[%s509 + $0x28] sm:$0xff]
                %522 = vst [vmem:[%s510 + $0x48] sm:$0xff] %v521
                %v523 = vld [vmem:[%s509 + $0x30] sm:$0xff]
                %524 = vst [vmem:[%s510 + $0x60] sm:$0xff] %v523
                %v525 = vld [vmem:[%s509 + $0x38] sm:$0xff]
                %526 = vst [vmem:[%s510 + $0x68] sm:$0xff] %v525
              $region87: #{downsampling_conv_block.1} parent=81 // loop_footer
                %s508 = sadd.s32 1, %s504
              $region88: #{downsampling_conv_block.1} parent=81 // loop_footer_branch
                %503 = sbr.rel target = $region84
              $region89: #{downsampling_conv_block.1} parent=81 // loop_exit
                _
            $region82: #{downsampling_conv_block.1} parent=77 // pred_fallthru
              _
            // Predicated region
            $region90: #{downsampling_conv_block.1} parent=77 // pred_check
              _
            $region91: #{downsampling_conv_block.1} parent=77 // pred_check_branch
              %528 = sbr.rel target = $region93
            $region92: #{downsampling_conv_block.1} parent=77 // pred_region
              _
            $region93: #{downsampling_conv_block.1} parent=77 // pred_fallthru
              _
          $region78: #{downsampling_conv_block.1} parent=73 // pred_fallthru
            _
          %529 = vnop
        $region74: #{downsampling_conv_block.1} parent=65 // pred_fallthru
          _
      $region66: #{downsampling_conv_block.1} parent=5 // pred_fallthru
        _
      %p530 = scmp.le.s32.totalorder 2, %s9
      // Predicated region
      $region94: #{downsampling_conv_block.1} parent=5 // pred_check
        %p531 = pneg %p530
      $region95: #{downsampling_conv_block.1} parent=5 // pred_check_branch
        %533 = sbr.rel (%p531) target = $region97
      $region96: #{downsampling_conv_block.1} parent=5 // pred_region
        %s534 = ssub.s32 %s9, 2
        // Predicated region
        $region98: #{downsampling_conv_block.1} parent=96 // pred_check
          %p535 = pneg %p122
        $region99: #{downsampling_conv_block.1} parent=96 // pred_check_branch
          %537 = sbr.rel (%p535) target = $region101
        $region100: #{downsampling_conv_block.1} parent=96 // pred_region
          %s538 = sand.u32 %s107, 1
          %s539 = sand.u32 %s107, 1
          %s540 = smul.addr %s539, 64
          %s541 = scalar_lea.vmem [#allocation3], %s540
        $region101: #{downsampling_conv_block.1} parent=96 // pred_fallthru
          _
      $region97: #{downsampling_conv_block.1} parent=5 // pred_fallthru
        _
    $region6: #{downsampling_conv_block.1} parent=1 // loop_footer
      %s13 = sadd.s32 1, %s9
    $region7: #{downsampling_conv_block.1} parent=1 // loop_footer_branch
      %8 = sbr.rel target = $region3
    $region8: #{downsampling_conv_block.1} parent=1 // loop_exit
      _

</llo_original>
